<compile_context>
chip_gen: v7x
topology: tpu7x:2x2x1
jax: 0.10.0
libtpu: 0.0.40
codegen_flags: <defaults>
</compile_context>

<pallas_src>
import jax
import jax.numpy as jnp
from jax.experimental import pallas as pl
from jax.experimental.pallas import tpu as pltpu

LANE = 128
SUBLANE = 8


def _rup(n, m):
    return ((n + m - 1) // m) * m


def ae_cond_kernel(x_ref, lab_ref, we1_ref, we2_ref, wd1_ref, wd2_ref, b_ref, out_ref):
    x = x_ref[...]                       # (TB, Dp) f32
    b = b_ref[...]                       # (8, Wmax) packed biases
    hp = we1_ref.shape[1]
    lp = we2_ref.shape[1]
    dp = wd2_ref.shape[1]
    be1 = b[0:1, :hp]
    be2 = b[1:2, :lp]
    bd1 = b[2:3, :hp]
    bd2 = b[3:4, :dp]

    # ---- encoder: Linear -> ReLU -> Linear ----
    h = jnp.maximum(
        jnp.dot(x, we1_ref[...], preferred_element_type=jnp.float32) + be1, 0.0)
    z = jnp.dot(h, we2_ref[...], preferred_element_type=jnp.float32) + be2

    # ---- decoder on cat([z, labels], dim=1) ----
    # z's padded columns (>= L) are zero; lab has the label at column L and zeros
    # elsewhere, so z + lab == cat([z, labels], zero-pad). One MXU matmul with the
    # full padded wd1 then replaces the concat + label broadcast.
    zc = z + lab_ref[...]
    h2 = jnp.maximum(
        jnp.dot(zc, wd1_ref[...], preferred_element_type=jnp.float32) + bd1, 0.0)
    y = jnp.dot(h2, wd2_ref[...], preferred_element_type=jnp.float32) + bd2
    out_ref[...] = jax.nn.sigmoid(y)


def prepare_params(params):
    """Zero-pad PyTorch-shaped params to 128-lane-multiple TPU shapes (done once)."""
    we1, be1, we2, be2, wd1, bd1, wd2, bd2 = params
    D, H = we1.shape
    L = we2.shape[1]
    Dp, Hp = _rup(D, LANE), _rup(H, LANE)
    Lp = _rup(L + 1, LANE)               # holds z (L cols) + the label column
    Wmax = max(Dp, Hp, Lp)

    def pad2(a, r, c):
        return jnp.zeros((r, c), jnp.float32).at[:a.shape[0], :a.shape[1]].set(a)

    we1p = pad2(we1, Dp, Hp)
    we2p = pad2(we2, Hp, Lp)
    wd1p = pad2(wd1, Lp, Hp)             # rows 0..L-1 = z weights, row L = label weight
    wd2p = pad2(wd2, Hp, Dp)

    bpack = jnp.zeros((SUBLANE, Wmax), jnp.float32)
    bpack = bpack.at[0, :H].set(be1)
    bpack = bpack.at[1, :L].set(be2)
    bpack = bpack.at[2, :H].set(bd1)
    bpack = bpack.at[3, :D].set(bd2)

    dims = dict(D=D, H=H, L=L, Dp=Dp, Hp=Hp, Lp=Lp)
    return (we1p, we2p, wd1p, wd2p, bpack), dims


def autoencoder_cond(x, padded_params, dims, *, tb=256):
    """x: (B, D) f32 with the label in the last column. Returns (B, D) f32."""
    we1p, we2p, wd1p, wd2p, bpack = padded_params
    B, D = x.shape
    assert D == dims["D"]
    L, Dp, Lp = dims["L"], dims["Dp"], dims["Lp"]

    # Decouple tile size from B: pad the batch; small batches run as one grid step.
    if B <= tb:
        tb_eff = _rup(B, SUBLANE)
        Bp = tb_eff
    else:
        tb_eff = tb
        Bp = _rup(B, tb)
    grid = (Bp // tb_eff,)

    xp = jnp.zeros((Bp, Dp), jnp.float32).at[:B, :D].set(x)
    # Label routed through a dedicated padded buffer (column L of a 128-wide block).
    lab = jnp.zeros((Bp, Lp), jnp.float32).at[:B, L].set(x[:, D - 1])

    def const_spec(a):
        return pl.BlockSpec(a.shape, lambda i: (0, 0))   # resident across grid steps

    out = pl.pallas_call(
        ae_cond_kernel,
        out_shape=jax.ShapeDtypeStruct((Bp, Dp), jnp.float32),
        grid=grid,
        in_specs=[
            pl.BlockSpec((tb_eff, Dp), lambda i: (i, 0)),   # x batch tile
            pl.BlockSpec((tb_eff, Lp), lambda i: (i, 0)),   # label batch tile
            const_spec(we1p), const_spec(we2p),
            const_spec(wd1p), const_spec(wd2p), const_spec(bpack),
        ],
        out_specs=pl.BlockSpec((tb_eff, Dp), lambda i: (i, 0)),
        compiler_params=pltpu.CompilerParams(
            dimension_semantics=("parallel",),
        ),
    )(xp, lab, we1p, we2p, wd1p, wd2p, bpack)

    # Drop padded batch rows and padded feature columns (sigmoid(0)=0.5 garbage).
    return out[:B, :D]


def init_params(key, D, H, L):
    """Deterministic PyTorch-Linear-style init: U(-1/sqrt(fan_in), 1/sqrt(fan_in))."""
    ks = jax.random.split(key, 8)

    def lin(kw, kb, fan_in, fan_out):
        bound = 1.0 / jnp.sqrt(jnp.float32(fan_in))
        w = jax.random.uniform(kw, (fan_in, fan_out), jnp.float32, -bound, bound)
        b = jax.random.uniform(kb, (fan_out,), jnp.float32, -bound, bound)
        return w, b

    we1, be1 = lin(ks[0], ks[1], D, H)          # encoder Linear(D, H)
    we2, be2 = lin(ks[2], ks[3], H, L)          # encoder Linear(H, L)
    wd1, bd1 = lin(ks[4], ks[5], L + 1, H)      # decoder Linear(L+1, H)
    wd2, bd2 = lin(ks[6], ks[7], H, D)          # decoder Linear(H, D)
    return (we1, be1, we2, be2, wd1, bd1, wd2, bd2)


def reference(x, params):
    we1, be1, we2, be2, wd1, bd1, wd2, bd2 = params
    labels = x[:, -1:]
    h = jnp.maximum(x @ we1 + be1, 0.0)
    z = h @ we2 + be2
    d_in = jnp.concatenate([z, labels], axis=1) @ wd1 + bd1
    y = jnp.maximum(d_in, 0.0) @ wd2 + bd2
    return jax.nn.sigmoid(y)


if __name__ == "__main__":
    B, D, H, L = 16, 65, 32, 16   # 64 "pixels" + 1 trailing label column

    key = jax.random.PRNGKey(0)
    kx, kl, kp = jax.random.split(key, 3)
    pixels = jax.random.uniform(kx, (B, D - 1), jnp.float32)
    labels = jax.random.randint(kl, (B, 1), 0, 10).astype(jnp.float32) / 10.0
    x = jnp.concatenate([pixels, labels], axis=1)   # (B, D)

    params = init_params(kp, D, H, L)
    padded_params, dims = prepare_params(params)

    out = autoencoder_cond(x, padded_params, dims)
    out = jax.block_until_ready(out)

    ref = reference(x, params)
    assert out.shape == (B, D) and out.dtype == jnp.float32
    assert jnp.allclose(out, ref, atol=1e-5, rtol=1e-5), "mismatch vs JAX reference"
    print("KERNEL_OK")
</pallas_src>

<mosaic_0001>
module attributes {stable_mosaic.version = 11 : i64} {
  func.func @ae_cond_kernel(%arg0: i32, %arg1: memref<16x128xf32, #tpu.memory_space<vmem>>, %arg2: memref<16x128xf32, #tpu.memory_space<vmem>>, %arg3: memref<128x128xf32, #tpu.memory_space<vmem>>, %arg4: memref<128x128xf32, #tpu.memory_space<vmem>>, %arg5: memref<128x128xf32, #tpu.memory_space<vmem>>, %arg6: memref<128x128xf32, #tpu.memory_space<vmem>>, %arg7: memref<8x128xf32, #tpu.memory_space<vmem>>, %arg8: memref<16x128xf32, #tpu.memory_space<vmem>>) attributes {dimension_semantics = [#tpu.dimension_semantics<parallel>], iteration_bounds = array<i64: 1>, scalar_prefetch = 0 : i64, scratch_operands = 0 : i64, tpu.core_type = #tpu.core_type<tc>, window_params = [{transform_indices = @transform_0, window_bounds = array<i64: 16, 128>}, {transform_indices = @transform_1, window_bounds = array<i64: 16, 128>}, {pipeline_mode = #tpu.pipeline_mode<synchronous>, transform_indices = @transform_2, window_bounds = array<i64: 128, 128>}, {pipeline_mode = #tpu.pipeline_mode<synchronous>, transform_indices = @transform_3, window_bounds = array<i64: 128, 128>}, {pipeline_mode = #tpu.pipeline_mode<synchronous>, transform_indices = @transform_4, window_bounds = array<i64: 128, 128>}, {pipeline_mode = #tpu.pipeline_mode<synchronous>, transform_indices = @transform_5, window_bounds = array<i64: 128, 128>}, {pipeline_mode = #tpu.pipeline_mode<synchronous>, transform_indices = @transform_6, window_bounds = array<i64: 8, 128>}, {transform_indices = @transform_7, window_bounds = array<i64: 16, 128>}]} {
    %c0 = arith.constant 0 : index
    %c0_0 = arith.constant 0 : index
    %0 = vector.load %arg1[%c0, %c0_0] : memref<16x128xf32, #tpu.memory_space<vmem>>, vector<16x128xf32>
    %c0_1 = arith.constant 0 : index
    %c0_2 = arith.constant 0 : index
    %1 = vector.load %arg7[%c0_1, %c0_2] : memref<8x128xf32, #tpu.memory_space<vmem>>, vector<8x128xf32>
    %2 = vector.extract_strided_slice %1 {offsets = [0, 0], sizes = [1, 128], strides = [1, 1]} : vector<8x128xf32> to vector<1x128xf32>
    %3 = vector.extract_strided_slice %1 {offsets = [1, 0], sizes = [1, 128], strides = [1, 1]} : vector<8x128xf32> to vector<1x128xf32>
    %4 = vector.extract_strided_slice %1 {offsets = [2, 0], sizes = [1, 128], strides = [1, 1]} : vector<8x128xf32> to vector<1x128xf32>
    %5 = vector.extract_strided_slice %1 {offsets = [3, 0], sizes = [1, 128], strides = [1, 1]} : vector<8x128xf32> to vector<1x128xf32>
    %c0_3 = arith.constant 0 : index
    %c0_4 = arith.constant 0 : index
    %6 = vector.load %arg3[%c0_3, %c0_4] : memref<128x128xf32, #tpu.memory_space<vmem>>, vector<128x128xf32>
    %cst = arith.constant dense<0.000000e+00> : vector<16x128xf32>
    %7 = tpu.matmul %0, %6, %cst {dimension_numbers = #tpu.dot_dimension_numbers<[1], [0], [0], [1], [0, 0, 1, 1], [], []>} : vector<16x128xf32>, vector<128x128xf32>, vector<16x128xf32> -> vector<16x128xf32>
    %8 = vector.broadcast %2 : vector<1x128xf32> to vector<16x128xf32>
    %9 = arith.addf %7, %8 : vector<16x128xf32>
    %cst_5 = arith.constant 0.000000e+00 : f32
    %10 = vector.broadcast %cst_5 : f32 to vector<16x128xf32>
    %11 = arith.maximumf %9, %10 : vector<16x128xf32>
    %c0_6 = arith.constant 0 : index
    %c0_7 = arith.constant 0 : index
    %12 = vector.load %arg4[%c0_6, %c0_7] : memref<128x128xf32, #tpu.memory_space<vmem>>, vector<128x128xf32>
    %cst_8 = arith.constant dense<0.000000e+00> : vector<16x128xf32>
    %13 = tpu.matmul %11, %12, %cst_8 {dimension_numbers = #tpu.dot_dimension_numbers<[1], [0], [0], [1], [0, 0, 1, 1], [], []>} : vector<16x128xf32>, vector<128x128xf32>, vector<16x128xf32> -> vector<16x128xf32>
    %14 = vector.broadcast %3 : vector<1x128xf32> to vector<16x128xf32>
    %15 = arith.addf %13, %14 : vector<16x128xf32>
    %c0_9 = arith.constant 0 : index
    %c0_10 = arith.constant 0 : index
    %16 = vector.load %arg2[%c0_9, %c0_10] : memref<16x128xf32, #tpu.memory_space<vmem>>, vector<16x128xf32>
    %17 = arith.addf %15, %16 : vector<16x128xf32>
    %c0_11 = arith.constant 0 : index
    %c0_12 = arith.constant 0 : index
    %18 = vector.load %arg5[%c0_11, %c0_12] : memref<128x128xf32, #tpu.memory_space<vmem>>, vector<128x128xf32>
    %cst_13 = arith.constant dense<0.000000e+00> : vector<16x128xf32>
    %19 = tpu.matmul %17, %18, %cst_13 {dimension_numbers = #tpu.dot_dimension_numbers<[1], [0], [0], [1], [0, 0, 1, 1], [], []>} : vector<16x128xf32>, vector<128x128xf32>, vector<16x128xf32> -> vector<16x128xf32>
    %20 = vector.broadcast %4 : vector<1x128xf32> to vector<16x128xf32>
    %21 = arith.addf %19, %20 : vector<16x128xf32>
    %cst_14 = arith.constant 0.000000e+00 : f32
    %22 = vector.broadcast %cst_14 : f32 to vector<16x128xf32>
    %23 = arith.maximumf %21, %22 : vector<16x128xf32>
    %c0_15 = arith.constant 0 : index
    %c0_16 = arith.constant 0 : index
    %24 = vector.load %arg6[%c0_15, %c0_16] : memref<128x128xf32, #tpu.memory_space<vmem>>, vector<128x128xf32>
    %cst_17 = arith.constant dense<0.000000e+00> : vector<16x128xf32>
    %25 = tpu.matmul %23, %24, %cst_17 {dimension_numbers = #tpu.dot_dimension_numbers<[1], [0], [0], [1], [0, 0, 1, 1], [], []>} : vector<16x128xf32>, vector<128x128xf32>, vector<16x128xf32> -> vector<16x128xf32>
    %26 = vector.broadcast %5 : vector<1x128xf32> to vector<16x128xf32>
    %27 = arith.addf %25, %26 : vector<16x128xf32>
    %28 = arith.negf %27 : vector<16x128xf32>
    %29 = math.exp %28 : vector<16x128xf32>
    %cst_18 = arith.constant 1.000000e+00 : f32
    %30 = vector.broadcast %cst_18 : f32 to vector<16x128xf32>
    %31 = arith.addf %30, %29 : vector<16x128xf32>
    %32 = arith.divf %30, %31 : vector<16x128xf32>
    %c0_19 = arith.constant 0 : index
    %c0_20 = arith.constant 0 : index
    %33 = vector.load %arg8[%c0_19, %c0_20] : memref<16x128xf32, #tpu.memory_space<vmem>>, vector<16x128xf32>
    tpu.vector_store %arg8[%c0_19, %c0_20], %32 {strides = array<i32>} : memref<16x128xf32, #tpu.memory_space<vmem>>, vector<16x128xf32>,
    return
  }
  func.func @transform_0(%arg0: i32) -> (i32, i32) {
    %c0_i32 = arith.constant 0 : i32
    %c0_i32_0 = arith.constant 0 : i32
    return %arg0, %c0_i32 : i32, i32
  }
  func.func @transform_1(%arg0: i32) -> (i32, i32) {
    %c0_i32 = arith.constant 0 : i32
    %c0_i32_0 = arith.constant 0 : i32
    return %arg0, %c0_i32 : i32, i32
  }
  func.func @transform_2(%arg0: i32) -> (i32, i32) {
    %c0_i32 = arith.constant 0 : i32
    %c0_i32_0 = arith.constant 0 : i32
    %c0_i32_1 = arith.constant 0 : i32
    return %c0_i32, %c0_i32_0 : i32, i32
  }
  func.func @transform_3(%arg0: i32) -> (i32, i32) {
    %c0_i32 = arith.constant 0 : i32
    %c0_i32_0 = arith.constant 0 : i32
    %c0_i32_1 = arith.constant 0 : i32
    return %c0_i32, %c0_i32_0 : i32, i32
  }
  func.func @transform_4(%arg0: i32) -> (i32, i32) {
    %c0_i32 = arith.constant 0 : i32
    %c0_i32_0 = arith.constant 0 : i32
    %c0_i32_1 = arith.constant 0 : i32
    return %c0_i32, %c0_i32_0 : i32, i32
  }
  func.func @transform_5(%arg0: i32) -> (i32, i32) {
    %c0_i32 = arith.constant 0 : i32
    %c0_i32_0 = arith.constant 0 : i32
    %c0_i32_1 = arith.constant 0 : i32
    return %c0_i32, %c0_i32_0 : i32, i32
  }
  func.func @transform_6(%arg0: i32) -> (i32, i32) {
    %c0_i32 = arith.constant 0 : i32
    %c0_i32_0 = arith.constant 0 : i32
    %c0_i32_1 = arith.constant 0 : i32
    return %c0_i32, %c0_i32_0 : i32, i32
  }
  func.func @transform_7(%arg0: i32) -> (i32, i32) {
    %c0_i32 = arith.constant 0 : i32
    %c0_i32_0 = arith.constant 0 : i32
    return %arg0, %c0_i32 : i32, i32
  }
}

</mosaic_0001>

<llo_original>
// kernel: tpu_custom_call.1
$region0: #{tpu_custom_call.1}
  #allocation0 [shape = 'u32[]', space=smem, size = 0x4, offset = 0x4, fixed_abs, tag = 'smem constant byte address 0x4 - core index']
  #allocation1 [shape = 'u32[144,128]{1,0:T(1,128)}', space=vmem, size = 0x12000, scoped, tag = 'internal scratch']
  %s0 = inlined_call_operand.hbm [shape: f32[16,128], index: 0, kind: input, shape index: {}]
  %s1 = inlined_call_operand.hbm [shape: f32[16,128], index: 1, kind: input, shape index: {}]
  %s2 = inlined_call_operand.hbm [shape: f32[128,128], index: 2, kind: input, shape index: {}]
  %s3 = inlined_call_operand.hbm [shape: f32[128,128], index: 3, kind: input, shape index: {}]
  %s4 = inlined_call_operand.hbm [shape: f32[128,128], index: 4, kind: input, shape index: {}]
  %s5 = inlined_call_operand.hbm [shape: f32[128,128], index: 5, kind: input, shape index: {}]
  %s6 = inlined_call_operand.vmem [shape: f32[8,128], index: 6, kind: input, shape index: {}]
  %s7 = inlined_call_operand.hbm [shape: f32[16,128], index: 7, kind: output, shape index: {}]
  %s8 = sld [smem:[#allocation0]]
  $region62: #{tpu_custom_call.1} parent=0
    _
  %s10 = ssub.s32 1, %s8
  %s11 = scalar_select 0, %s10, %s8
  $region1: #{tpu_custom_call.1} parent=0
    #allocation2 [shape = 'u8[8192]{0}', space=vmem, size = 0x2000, scoped, tag = 'input window, operand 0, single buffered']
    #allocation3 [shape = 's32[1]{0}', space=sflag, size = 0x4, scoped, tag = 'scoped memory for tpu_custom_call.1']
    #allocation4 [shape = 's32[1]{0}', space=sflag, size = 0x4, scoped, tag = 'scoped memory for tpu_custom_call.1']
    #allocation5 [shape = 'u8[8192]{0}', space=vmem, size = 0x2000, scoped, tag = 'input window, operand 1, single buffered']
    #allocation6 [shape = 's32[1]{0}', space=sflag, size = 0x4, scoped, tag = 'scoped memory for tpu_custom_call.1']
    #allocation7 [shape = 'u8[65536]{0}', space=vmem, size = 0x10000, scoped, tag = 'input window, operand 2, single buffered']
    #allocation8 [shape = 'u8[65536]{0}', space=vmem, size = 0x10000, scoped, tag = 'input window, operand 3, single buffered']
    #allocation9 [shape = 's32[1]{0}', space=sflag, size = 0x4, scoped, tag = 'scoped memory for tpu_custom_call.1']
    #allocation10 [shape = 'u8[65536]{0}', space=vmem, size = 0x10000, scoped, tag = 'input window, operand 4, single buffered']
    #allocation11 [shape = 'u8[65536]{0}', space=vmem, size = 0x10000, scoped, tag = 'input window, operand 5, single buffered']
    #allocation12 [shape = 's32[1]{0}', space=sflag, size = 0x4, scoped, tag = 'scoped memory for tpu_custom_call.1']
    #allocation13 [shape = 'u8[8192]{0}', space=vmem, size = 0x2000, scoped, tag = 'output window, operand 0, single buffered']
    %12 = vsyncpa [#allocation3], 0
    %13 = vsyncpa [#allocation6], 0
    %14 = vsyncpa [#allocation9], 0
    %15 = vsyncpa [#allocation12], 0
    %16 = vsyncpa [#allocation4], 0
    // Predicated region
    $region2: #{tpu_custom_call.1} parent=1 // pred_check
      _
    $region3: #{tpu_custom_call.1} parent=1 // pred_check_branch
      %18 = sbr.rel (0) target = $region5
    $region4: #{tpu_custom_call.1} parent=1 // pred_region
      %s20 = ssub.s32 256, 256
      %21 = vsyncadd [#allocation3], %s20
      %s22 = sshll.u32 [#allocation2], 4
      %s23 = int_to_ptr.vmem [resolvable:$true] %s22
      %28 = dma.hbm_to_vmem [thread:$0]  %s0, 256, %s23, [#allocation3], 128, 128, 8
    $region5: #{tpu_custom_call.1} parent=1 // pred_fallthru
      _
    // Predicated region
    $region6: #{tpu_custom_call.1} parent=1 // pred_check
      _
    $region7: #{tpu_custom_call.1} parent=1 // pred_check_branch
      %30 = sbr.rel (0) target = $region9
    $region8: #{tpu_custom_call.1} parent=1 // pred_region
      %s32 = ssub.s32 256, 256
      %33 = vsyncadd [#allocation6], %s32
      %s34 = sshll.u32 [#allocation5], 4
      %s35 = int_to_ptr.vmem [resolvable:$true] %s34
      %40 = dma.hbm_to_vmem [thread:$0]  %s1, 256, %s35, [#allocation6], 128, 128, 8
    $region9: #{tpu_custom_call.1} parent=1 // pred_fallthru
      _
    // Predicated region
    $region10: #{tpu_custom_call.1} parent=1 // pred_check
      _
    $region11: #{tpu_custom_call.1} parent=1 // pred_check_branch
      %42 = sbr.rel (0) target = $region13
    $region12: #{tpu_custom_call.1} parent=1 // pred_region
      %s44 = ssub.s32 2048, 2048
      %45 = vsyncadd [#allocation6], %s44
      %s46 = sshll.u32 [#allocation7], 4
      %s47 = int_to_ptr.vmem [resolvable:$true] %s46
      %52 = dma.hbm_to_vmem [thread:$0]  %s2, 2048, %s47, [#allocation6], 128, 128, 8
    $region13: #{tpu_custom_call.1} parent=1 // pred_fallthru
      _
    // Predicated region
    $region14: #{tpu_custom_call.1} parent=1 // pred_check
      _
    $region15: #{tpu_custom_call.1} parent=1 // pred_check_branch
      %54 = sbr.rel (0) target = $region17
    $region16: #{tpu_custom_call.1} parent=1 // pred_region
      %s56 = ssub.s32 2048, 2048
      %57 = vsyncadd [#allocation9], %s56
      %s58 = sshll.u32 [#allocation8], 4
      %s59 = int_to_ptr.vmem [resolvable:$true] %s58
      %64 = dma.hbm_to_vmem [thread:$0]  %s3, 2048, %s59, [#allocation9], 128, 128, 8
    $region17: #{tpu_custom_call.1} parent=1 // pred_fallthru
      _
    // Predicated region
    $region18: #{tpu_custom_call.1} parent=1 // pred_check
      _
    $region19: #{tpu_custom_call.1} parent=1 // pred_check_branch
      %66 = sbr.rel (0) target = $region21
    $region20: #{tpu_custom_call.1} parent=1 // pred_region
      %s68 = ssub.s32 2048, 2048
      %69 = vsyncadd [#allocation9], %s68
      %s70 = sshll.u32 [#allocation10], 4
      %s71 = int_to_ptr.vmem [resolvable:$true] %s70
      %76 = dma.hbm_to_vmem [thread:$0]  %s4, 2048, %s71, [#allocation9], 128, 128, 8
    $region21: #{tpu_custom_call.1} parent=1 // pred_fallthru
      _
    // Predicated region
    $region22: #{tpu_custom_call.1} parent=1 // pred_check
      _
    $region23: #{tpu_custom_call.1} parent=1 // pred_check_branch
      %78 = sbr.rel (0) target = $region25
    $region24: #{tpu_custom_call.1} parent=1 // pred_region
      %s80 = ssub.s32 2048, 2048
      %81 = vsyncadd [#allocation12], %s80
      %s82 = sshll.u32 [#allocation11], 4
      %s83 = int_to_ptr.vmem [resolvable:$true] %s82
      %88 = dma.hbm_to_vmem [thread:$0]  %s5, 2048, %s83, [#allocation12], 128, 128, 8
    $region25: #{tpu_custom_call.1} parent=1 // pred_fallthru
      _
    // Predicated region
    $region26: #{tpu_custom_call.1} parent=1 // pred_check
      _
    $region27: #{tpu_custom_call.1} parent=1 // pred_check_branch
      %90 = sbr.rel (0) target = $region29
    $region28: #{tpu_custom_call.1} parent=1 // pred_region
      _
    $region29: #{tpu_custom_call.1} parent=1 // pred_fallthru
      _
    // Predicated region
    $region30: #{tpu_custom_call.1} parent=1 // pred_check
      _
    $region31: #{tpu_custom_call.1} parent=1 // pred_check_branch
      %92 = sbr.rel (0) target = $region33
    $region32: #{tpu_custom_call.1} parent=1 // pred_region
      %93 = dma.done [#allocation3], 256
    $region33: #{tpu_custom_call.1} parent=1 // pred_fallthru
      _
    // Predicated region
    $region34: #{tpu_custom_call.1} parent=1 // pred_check
      _
    $region35: #{tpu_custom_call.1} parent=1 // pred_check_branch
      %95 = sbr.rel (0) target = $region37
    $region36: #{tpu_custom_call.1} parent=1 // pred_region
      %96 = dma.done [#allocation6], 256
    $region37: #{tpu_custom_call.1} parent=1 // pred_fallthru
      _
    // Predicated region
    $region38: #{tpu_custom_call.1} parent=1 // pred_check
      _
    $region39: #{tpu_custom_call.1} parent=1 // pred_check_branch
      %98 = sbr.rel (0) target = $region41
    $region40: #{tpu_custom_call.1} parent=1 // pred_region
      %99 = dma.done [#allocation6], 2048
    $region41: #{tpu_custom_call.1} parent=1 // pred_fallthru
      _
    // Predicated region
    $region42: #{tpu_custom_call.1} parent=1 // pred_check
      _
    $region43: #{tpu_custom_call.1} parent=1 // pred_check_branch
      %101 = sbr.rel (0) target = $region45
    $region44: #{tpu_custom_call.1} parent=1 // pred_region
      %102 = dma.done [#allocation9], 2048
    $region45: #{tpu_custom_call.1} parent=1 // pred_fallthru
      _
    // Predicated region
    $region46: #{tpu_custom_call.1} parent=1 // pred_check
      _
    $region47: #{tpu_custom_call.1} parent=1 // pred_check_branch
      %104 = sbr.rel (0) target = $region49
    $region48: #{tpu_custom_call.1} parent=1 // pred_region
      %105 = dma.done [#allocation9], 2048
    $region49: #{tpu_custom_call.1} parent=1 // pred_fallthru
      _
    // Predicated region
    $region50: #{tpu_custom_call.1} parent=1 // pred_check
      _
    $region51: #{tpu_custom_call.1} parent=1 // pred_check_branch
      %107 = sbr.rel (0) target = $region53
    $region52: #{tpu_custom_call.1} parent=1 // pred_region
      %108 = dma.done [#allocation12], 2048
    $region53: #{tpu_custom_call.1} parent=1 // pred_fallthru
      _
    %v109 = vld [vmem:[#allocation2] sm:$0xff]
    %v110 = vld [vmem:[#allocation2 + $0x8] sm:$0xff]
    %v111 = vld [vmem:[%s6] sm:$0xff]
    %v112 = vld [vmem:[#allocation7] sm:$0xff]
    %v113 = vld [vmem:[#allocation7 + $0x8] sm:$0xff]
    %v114 = vld [vmem:[#allocation7 + $0x10] sm:$0xff]
    %v115 = vld [vmem:[#allocation7 + $0x18] sm:$0xff]
    %v116 = vld [vmem:[#allocation7 + $0x20] sm:$0xff]
    %v117 = vld [vmem:[#allocation7 + $0x28] sm:$0xff]
    %v118 = vld [vmem:[#allocation7 + $0x30] sm:$0xff]
    %v119 = vld [vmem:[#allocation7 + $0x38] sm:$0xff]
    %v120 = vld [vmem:[#allocation7 + $0x40] sm:$0xff]
    %v121 = vld [vmem:[#allocation7 + $0x48] sm:$0xff]
    %v122 = vld [vmem:[#allocation7 + $0x50] sm:$0xff]
    %v123 = vld [vmem:[#allocation7 + $0x58] sm:$0xff]
    %v124 = vld [vmem:[#allocation7 + $0x60] sm:$0xff]
    %v125 = vld [vmem:[#allocation7 + $0x68] sm:$0xff]
    %v126 = vld [vmem:[#allocation7 + $0x70] sm:$0xff]
    %v127 = vld [vmem:[#allocation7 + $0x78] sm:$0xff]
    %v128 = vlaneseq
    %v129 = vshrl.u32 %v128, 7
    %v130 = vsub.s32 0, %v129
    %v131 = vrot.slane %v111, %v130
    %132 = vmatprep.subr.mxu0 0.0
    %133 = vmatpush1.msra.mxu0 %v112
    %134 = vmatprep.subr.mxu0 0.0
    %135 = vmatpush1.msra.mxu0 %v113
    %136 = vmatprep.subr.mxu0 0.0
    %137 = vmatpush1.msra.mxu0 %v114
    %138 = vmatprep.subr.mxu0 0.0
    %139 = vmatpush1.msra.mxu0 %v115
    %140 = vmatprep.subr.mxu0 0.0
    %141 = vmatpush1.msra.mxu0 %v116
    %142 = vmatprep.subr.mxu0 0.0
    %143 = vmatpush1.msra.mxu0 %v117
    %144 = vmatprep.subr.mxu0 0.0
    %145 = vmatpush1.msra.mxu0 %v118
    %146 = vmatprep.subr.mxu0 0.0
    %147 = vmatpush1.msra.mxu0 %v119
    %148 = vmatprep.subr.mxu0 0.0
    %149 = vmatpush1.msra.mxu0 %v120
    %150 = vmatprep.subr.mxu0 0.0
    %151 = vmatpush1.msra.mxu0 %v121
    %152 = vmatprep.subr.mxu0 0.0
    %153 = vmatpush1.msra.mxu0 %v122
    %154 = vmatprep.subr.mxu0 0.0
    %155 = vmatpush1.msra.mxu0 %v123
    %156 = vmatprep.subr.mxu0 0.0
    %157 = vmatpush1.msra.mxu0 %v124
    %158 = vmatprep.subr.mxu0 0.0
    %159 = vmatpush1.msra.mxu0 %v125
    %160 = vmatprep.subr.mxu0 0.0
    %161 = vmatpush1.msra.mxu0 %v126
    %162 = vmatprep.subr.mxu0 0.0
    %163 = vmatpush1.msra.mxu0 %v127
    %164 = vmatprep.subr.mxu0 0.0
    %165 = vmatpush1.msra.mxu0 0.0
    %166 = vmatprep.subr.mxu0 0.0
    %167 = vmatpush1.msra.mxu0 0.0
    %168 = vmatprep.subr.mxu0 0.0
    %169 = vmatpush1.msra.mxu0 0.0
    %170 = vmatprep.subr.mxu0 0.0
    %171 = vmatpush1.msra.mxu0 0.0
    %172 = vmatprep.subr.mxu0 0.0
    %173 = vmatpush1.msra.mxu0 0.0
    %174 = vmatprep.subr.mxu0 0.0
    %175 = vmatpush1.msra.mxu0 0.0
    %176 = vmatprep.subr.mxu0 0.0
    %177 = vmatpush1.msra.mxu0 0.0
    %178 = vmatprep.subr.mxu0 0.0
    %179 = vmatpush1.msra.mxu0 0.0
    %180 = vmatprep.subr.mxu0 0.0
    %181 = vmatpush1.msra.mxu0 0.0
    %182 = vmatprep.subr.mxu0 0.0
    %183 = vmatpush1.msra.mxu0 0.0
    %184 = vmatprep.subr.mxu0 0.0
    %185 = vmatpush1.msra.mxu0 0.0
    %186 = vmatprep.subr.mxu0 0.0
    %187 = vmatpush1.msra.mxu0 0.0
    %188 = vmatprep.subr.mxu0 0.0
    %189 = vmatpush1.msra.mxu0 0.0
    %190 = vmatprep.subr.mxu0 0.0
    %191 = vmatpush1.msra.mxu0 0.0
    %192 = vmatprep.subr.mxu0 0.0
    %193 = vmatpush1.msra.mxu0 0.0
    %194 = vmatprep.subr.mxu0 0.0
    %195 = vmatpush1.msra.mxu0 0.0
    %196 = vmatprep.mubr.f32.mxu0 0.0
    %197 = vmatmul.mubr.f32.gmra.mrb[0].mxu0 %v109
    %v198 = vpop.f32.mrb[0].mxu0
    %v199 = vadd.f32 %v131, %v198
    %v200 = vpop.f32.mrb[0].mxu0
    %201 = vmatprep.mubr.f32.mxu0 0.0
    %202 = vmatmul.mubr.f32.gmra.mrb[0].mxu0 %v110
    %v203 = vpop.f32.mrb[0].mxu0
    %v204 = vadd.f32 %v131, %v203
    %v205 = vpop.f32.mrb[0].mxu0
    %206 = vdwg.mxu0
    %v207 = vmax.f32 %v199, 0.0
    %v208 = vmax.f32 %v204, 0.0
    %v209 = vld [vmem:[#allocation8] sm:$0xff]
    %v210 = vld [vmem:[#allocation8 + $0x8] sm:$0xff]
    %v211 = vld [vmem:[#allocation8 + $0x10] sm:$0xff]
    %v212 = vld [vmem:[#allocation8 + $0x18] sm:$0xff]
    %v213 = vld [vmem:[#allocation8 + $0x20] sm:$0xff]
    %v214 = vld [vmem:[#allocation8 + $0x28] sm:$0xff]
    %v215 = vld [vmem:[#allocation8 + $0x30] sm:$0xff]
    %v216 = vld [vmem:[#allocation8 + $0x38] sm:$0xff]
    %v217 = vld [vmem:[#allocation8 + $0x40] sm:$0xff]
    %v218 = vld [vmem:[#allocation8 + $0x48] sm:$0xff]
    %v219 = vld [vmem:[#allocation8 + $0x50] sm:$0xff]
    %v220 = vld [vmem:[#allocation8 + $0x58] sm:$0xff]
    %v221 = vld [vmem:[#allocation8 + $0x60] sm:$0xff]
    %v222 = vld [vmem:[#allocation8 + $0x68] sm:$0xff]
    %v223 = vld [vmem:[#allocation8 + $0x70] sm:$0xff]
    %v224 = vld [vmem:[#allocation8 + $0x78] sm:$0xff]
    %v225 = vlaneseq
    %v226 = vshrl.u32 %v225, 7
    %v227 = vsub.s32 1, %v226
    %v228 = vrot.slane %v111, %v227
    %229 = vmatprep.subr.mxu0 0.0
    %230 = vmatpush1.msra.mxu0 %v209
    %231 = vmatprep.subr.mxu0 0.0
    %232 = vmatpush1.msra.mxu0 %v210
    %233 = vmatprep.subr.mxu0 0.0
    %234 = vmatpush1.msra.mxu0 %v211
    %235 = vmatprep.subr.mxu0 0.0
    %236 = vmatpush1.msra.mxu0 %v212
    %237 = vmatprep.subr.mxu0 0.0
    %238 = vmatpush1.msra.mxu0 %v213
    %239 = vmatprep.subr.mxu0 0.0
    %240 = vmatpush1.msra.mxu0 %v214
    %241 = vmatprep.subr.mxu0 0.0
    %242 = vmatpush1.msra.mxu0 %v215
    %243 = vmatprep.subr.mxu0 0.0
    %244 = vmatpush1.msra.mxu0 %v216
    %245 = vmatprep.subr.mxu0 0.0
    %246 = vmatpush1.msra.mxu0 %v217
    %247 = vmatprep.subr.mxu0 0.0
    %248 = vmatpush1.msra.mxu0 %v218
    %249 = vmatprep.subr.mxu0 0.0
    %250 = vmatpush1.msra.mxu0 %v219
    %251 = vmatprep.subr.mxu0 0.0
    %252 = vmatpush1.msra.mxu0 %v220
    %253 = vmatprep.subr.mxu0 0.0
    %254 = vmatpush1.msra.mxu0 %v221
    %255 = vmatprep.subr.mxu0 0.0
    %256 = vmatpush1.msra.mxu0 %v222
    %257 = vmatprep.subr.mxu0 0.0
    %258 = vmatpush1.msra.mxu0 %v223
    %259 = vmatprep.subr.mxu0 0.0
    %260 = vmatpush1.msra.mxu0 %v224
    %261 = vmatprep.subr.mxu0 0.0
    %262 = vmatpush1.msra.mxu0 0.0
    %263 = vmatprep.subr.mxu0 0.0
    %264 = vmatpush1.msra.mxu0 0.0
    %265 = vmatprep.subr.mxu0 0.0
    %266 = vmatpush1.msra.mxu0 0.0
    %267 = vmatprep.subr.mxu0 0.0
    %268 = vmatpush1.msra.mxu0 0.0
    %269 = vmatprep.subr.mxu0 0.0
    %270 = vmatpush1.msra.mxu0 0.0
    %271 = vmatprep.subr.mxu0 0.0
    %272 = vmatpush1.msra.mxu0 0.0
    %273 = vmatprep.subr.mxu0 0.0
    %274 = vmatpush1.msra.mxu0 0.0
    %275 = vmatprep.subr.mxu0 0.0
    %276 = vmatpush1.msra.mxu0 0.0
    %277 = vmatprep.subr.mxu0 0.0
    %278 = vmatpush1.msra.mxu0 0.0
    %279 = vmatprep.subr.mxu0 0.0
    %280 = vmatpush1.msra.mxu0 0.0
    %281 = vmatprep.subr.mxu0 0.0
    %282 = vmatpush1.msra.mxu0 0.0
    %283 = vmatprep.subr.mxu0 0.0
    %284 = vmatpush1.msra.mxu0 0.0
    %285 = vmatprep.subr.mxu0 0.0
    %286 = vmatpush1.msra.mxu0 0.0
    %287 = vmatprep.subr.mxu0 0.0
    %288 = vmatpush1.msra.mxu0 0.0
    %289 = vmatprep.subr.mxu0 0.0
    %290 = vmatpush1.msra.mxu0 0.0
    %291 = vmatprep.subr.mxu0 0.0
    %292 = vmatpush1.msra.mxu0 0.0
    %293 = vmatprep.mubr.f32.mxu0 0.0
    %294 = vmatmul.mubr.f32.gmra.mrb[0].mxu0 %v207
    %v295 = vpop.f32.mrb[0].mxu0
    %v296 = vadd.f32 %v228, %v295
    %v297 = vpop.f32.mrb[0].mxu0
    %298 = vmatprep.mubr.f32.mxu0 0.0
    %299 = vmatmul.mubr.f32.gmra.mrb[0].mxu0 %v208
    %v300 = vpop.f32.mrb[0].mxu0
    %v301 = vadd.f32 %v228, %v300
    %v302 = vpop.f32.mrb[0].mxu0
    %303 = vdwg.mxu0
    %v304 = vld [vmem:[#allocation5] sm:$0xff]
    %v305 = vld [vmem:[#allocation5 + $0x8] sm:$0xff]
    %v306 = vadd.f32 %v296, %v304
    %v307 = vadd.f32 %v301, %v305
    %v308 = vld [vmem:[#allocation10] sm:$0xff]
    %v309 = vld [vmem:[#allocation10 + $0x8] sm:$0xff]
    %v310 = vld [vmem:[#allocation10 + $0x10] sm:$0xff]
    %v311 = vld [vmem:[#allocation10 + $0x18] sm:$0xff]
    %v312 = vld [vmem:[#allocation10 + $0x20] sm:$0xff]
    %v313 = vld [vmem:[#allocation10 + $0x28] sm:$0xff]
    %v314 = vld [vmem:[#allocation10 + $0x30] sm:$0xff]
    %v315 = vld [vmem:[#allocation10 + $0x38] sm:$0xff]
    %v316 = vld [vmem:[#allocation10 + $0x40] sm:$0xff]
    %v317 = vld [vmem:[#allocation10 + $0x48] sm:$0xff]
    %v318 = vld [vmem:[#allocation10 + $0x50] sm:$0xff]
    %v319 = vld [vmem:[#allocation10 + $0x58] sm:$0xff]
    %v320 = vld [vmem:[#allocation10 + $0x60] sm:$0xff]
    %v321 = vld [vmem:[#allocation10 + $0x68] sm:$0xff]
    %v322 = vld [vmem:[#allocation10 + $0x70] sm:$0xff]
    %v323 = vld [vmem:[#allocation10 + $0x78] sm:$0xff]
    %v324 = vlaneseq
    %v325 = vshrl.u32 %v324, 7
    %v326 = vsub.s32 2, %v325
    %v327 = vrot.slane %v111, %v326
    %328 = vmatprep.subr.mxu0 0.0
    %329 = vmatpush1.msra.mxu0 %v308
    %330 = vmatprep.subr.mxu0 0.0
    %331 = vmatpush1.msra.mxu0 %v309
    %332 = vmatprep.subr.mxu0 0.0
    %333 = vmatpush1.msra.mxu0 %v310
    %334 = vmatprep.subr.mxu0 0.0
    %335 = vmatpush1.msra.mxu0 %v311
    %336 = vmatprep.subr.mxu0 0.0
    %337 = vmatpush1.msra.mxu0 %v312
    %338 = vmatprep.subr.mxu0 0.0
    %339 = vmatpush1.msra.mxu0 %v313
    %340 = vmatprep.subr.mxu0 0.0
    %341 = vmatpush1.msra.mxu0 %v314
    %342 = vmatprep.subr.mxu0 0.0
    %343 = vmatpush1.msra.mxu0 %v315
    %344 = vmatprep.subr.mxu0 0.0
    %345 = vmatpush1.msra.mxu0 %v316
    %346 = vmatprep.subr.mxu0 0.0
    %347 = vmatpush1.msra.mxu0 %v317
    %348 = vmatprep.subr.mxu0 0.0
    %349 = vmatpush1.msra.mxu0 %v318
    %350 = vmatprep.subr.mxu0 0.0
    %351 = vmatpush1.msra.mxu0 %v319
    %352 = vmatprep.subr.mxu0 0.0
    %353 = vmatpush1.msra.mxu0 %v320
    %354 = vmatprep.subr.mxu0 0.0
    %355 = vmatpush1.msra.mxu0 %v321
    %356 = vmatprep.subr.mxu0 0.0
    %357 = vmatpush1.msra.mxu0 %v322
    %358 = vmatprep.subr.mxu0 0.0
    %359 = vmatpush1.msra.mxu0 %v323
    %360 = vmatprep.subr.mxu0 0.0
    %361 = vmatpush1.msra.mxu0 0.0
    %362 = vmatprep.subr.mxu0 0.0
    %363 = vmatpush1.msra.mxu0 0.0
    %364 = vmatprep.subr.mxu0 0.0
    %365 = vmatpush1.msra.mxu0 0.0
    %366 = vmatprep.subr.mxu0 0.0
    %367 = vmatpush1.msra.mxu0 0.0
    %368 = vmatprep.subr.mxu0 0.0
    %369 = vmatpush1.msra.mxu0 0.0
    %370 = vmatprep.subr.mxu0 0.0
    %371 = vmatpush1.msra.mxu0 0.0
    %372 = vmatprep.subr.mxu0 0.0
    %373 = vmatpush1.msra.mxu0 0.0
    %374 = vmatprep.subr.mxu0 0.0
    %375 = vmatpush1.msra.mxu0 0.0
    %376 = vmatprep.subr.mxu0 0.0
    %377 = vmatpush1.msra.mxu0 0.0
    %378 = vmatprep.subr.mxu0 0.0
    %379 = vmatpush1.msra.mxu0 0.0
    %380 = vmatprep.subr.mxu0 0.0
    %381 = vmatpush1.msra.mxu0 0.0
    %382 = vmatprep.subr.mxu0 0.0
    %383 = vmatpush1.msra.mxu0 0.0
    %384 = vmatprep.subr.mxu0 0.0
    %385 = vmatpush1.msra.mxu0 0.0
    %386 = vmatprep.subr.mxu0 0.0
    %387 = vmatpush1.msra.mxu0 0.0
    %388 = vmatprep.subr.mxu0 0.0
    %389 = vmatpush1.msra.mxu0 0.0
    %390 = vmatprep.subr.mxu0 0.0
    %391 = vmatpush1.msra.mxu0 0.0
    %392 = vmatprep.mubr.f32.mxu0 0.0
    %393 = vmatmul.mubr.f32.gmra.mrb[0].mxu0 %v306
    %v394 = vpop.f32.mrb[0].mxu0
    %v395 = vadd.f32 %v327, %v394
    %v396 = vpop.f32.mrb[0].mxu0
    %397 = vmatprep.mubr.f32.mxu0 0.0
    %398 = vmatmul.mubr.f32.gmra.mrb[0].mxu0 %v307
    %v399 = vpop.f32.mrb[0].mxu0
    %v400 = vadd.f32 %v327, %v399
    %v401 = vpop.f32.mrb[0].mxu0
    %402 = vdwg.mxu0
    %v403 = vmax.f32 %v395, 0.0
    %v404 = vmax.f32 %v400, 0.0
    %v405 = vld [vmem:[#allocation11] sm:$0xff]
    %v406 = vld [vmem:[#allocation11 + $0x8] sm:$0xff]
    %v407 = vld [vmem:[#allocation11 + $0x10] sm:$0xff]
    %v408 = vld [vmem:[#allocation11 + $0x18] sm:$0xff]
    %v409 = vld [vmem:[#allocation11 + $0x20] sm:$0xff]
    %v410 = vld [vmem:[#allocation11 + $0x28] sm:$0xff]
    %v411 = vld [vmem:[#allocation11 + $0x30] sm:$0xff]
    %v412 = vld [vmem:[#allocation11 + $0x38] sm:$0xff]
    %v413 = vld [vmem:[#allocation11 + $0x40] sm:$0xff]
    %v414 = vld [vmem:[#allocation11 + $0x48] sm:$0xff]
    %v415 = vld [vmem:[#allocation11 + $0x50] sm:$0xff]
    %v416 = vld [vmem:[#allocation11 + $0x58] sm:$0xff]
    %v417 = vld [vmem:[#allocation11 + $0x60] sm:$0xff]
    %v418 = vld [vmem:[#allocation11 + $0x68] sm:$0xff]
    %v419 = vld [vmem:[#allocation11 + $0x70] sm:$0xff]
    %v420 = vld [vmem:[#allocation11 + $0x78] sm:$0xff]
    %v421 = vlaneseq
    %v422 = vshrl.u32 %v421, 7
    %v423 = vsub.s32 3, %v422
    %v424 = vrot.slane %v111, %v423
    %425 = vmatprep.subr.mxu0 0.0
    %426 = vmatpush1.msra.mxu0 %v405
    %427 = vmatprep.subr.mxu0 0.0
    %428 = vmatpush1.msra.mxu0 %v406
    %429 = vmatprep.subr.mxu0 0.0
    %430 = vmatpush1.msra.mxu0 %v407
    %431 = vmatprep.subr.mxu0 0.0
    %432 = vmatpush1.msra.mxu0 %v408
    %433 = vmatprep.subr.mxu0 0.0
    %434 = vmatpush1.msra.mxu0 %v409
    %435 = vmatprep.subr.mxu0 0.0
    %436 = vmatpush1.msra.mxu0 %v410
    %437 = vmatprep.subr.mxu0 0.0
    %438 = vmatpush1.msra.mxu0 %v411
    %439 = vmatprep.subr.mxu0 0.0
    %440 = vmatpush1.msra.mxu0 %v412
    %441 = vmatprep.subr.mxu0 0.0
    %442 = vmatpush1.msra.mxu0 %v413
    %443 = vmatprep.subr.mxu0 0.0
    %444 = vmatpush1.msra.mxu0 %v414
    %445 = vmatprep.subr.mxu0 0.0
    %446 = vmatpush1.msra.mxu0 %v415
    %447 = vmatprep.subr.mxu0 0.0
    %448 = vmatpush1.msra.mxu0 %v416
    %449 = vmatprep.subr.mxu0 0.0
    %450 = vmatpush1.msra.mxu0 %v417
    %451 = vmatprep.subr.mxu0 0.0
    %452 = vmatpush1.msra.mxu0 %v418
    %453 = vmatprep.subr.mxu0 0.0
    %454 = vmatpush1.msra.mxu0 %v419
    %455 = vmatprep.subr.mxu0 0.0
    %456 = vmatpush1.msra.mxu0 %v420
    %457 = vmatprep.subr.mxu0 0.0
    %458 = vmatpush1.msra.mxu0 0.0
    %459 = vmatprep.subr.mxu0 0.0
    %460 = vmatpush1.msra.mxu0 0.0
    %461 = vmatprep.subr.mxu0 0.0
    %462 = vmatpush1.msra.mxu0 0.0
    %463 = vmatprep.subr.mxu0 0.0
    %464 = vmatpush1.msra.mxu0 0.0
    %465 = vmatprep.subr.mxu0 0.0
    %466 = vmatpush1.msra.mxu0 0.0
    %467 = vmatprep.subr.mxu0 0.0
    %468 = vmatpush1.msra.mxu0 0.0
    %469 = vmatprep.subr.mxu0 0.0
    %470 = vmatpush1.msra.mxu0 0.0
    %471 = vmatprep.subr.mxu0 0.0
    %472 = vmatpush1.msra.mxu0 0.0
    %473 = vmatprep.subr.mxu0 0.0
    %474 = vmatpush1.msra.mxu0 0.0
    %475 = vmatprep.subr.mxu0 0.0
    %476 = vmatpush1.msra.mxu0 0.0
    %477 = vmatprep.subr.mxu0 0.0
    %478 = vmatpush1.msra.mxu0 0.0
    %479 = vmatprep.subr.mxu0 0.0
    %480 = vmatpush1.msra.mxu0 0.0
    %481 = vmatprep.subr.mxu0 0.0
    %482 = vmatpush1.msra.mxu0 0.0
    %483 = vmatprep.subr.mxu0 0.0
    %484 = vmatpush1.msra.mxu0 0.0
    %485 = vmatprep.subr.mxu0 0.0
    %486 = vmatpush1.msra.mxu0 0.0
    %487 = vmatprep.subr.mxu0 0.0
    %488 = vmatpush1.msra.mxu0 0.0
    %489 = vmatprep.mubr.f32.mxu0 0.0
    %490 = vmatmul.mubr.f32.gmra.mrb[0].mxu0 %v403
    %v491 = vpop.f32.mrb[0].mxu0
    %v492 = vadd.f32 %v424, %v491
    %v493 = vpop.f32.mrb[0].mxu0
    %494 = vmatprep.mubr.f32.mxu0 0.0
    %495 = vmatmul.mubr.f32.gmra.mrb[0].mxu0 %v404
    %v496 = vpop.f32.mrb[0].mxu0
    %v497 = vadd.f32 %v424, %v496
    %v498 = vpop.f32.mrb[0].mxu0
    %499 = vdwg.mxu0
    %v500 = vxor.u32 %v492, 2147483648
    %v501 = vxor.u32 %v497, 2147483648
    %v502 = vmul.f32 %v500, 1.442695
    %v503 = vpow.pop %v502
    %v504 = vmul.f32 %v501, 1.442695
    %v505 = vpow.pop %v504
    %v506 = vadd.f32 %v503, 1.0
    %v507 = vadd.f32 %v505, 1.0
    %v508 = vrcp.pop %v506
    %v509 = vmul.f32 1.0, %v508
    %v510 = vrcp.pop %v507
    %v511 = vmul.f32 1.0, %v510
    %512 = vst [vmem:[#allocation13] sm:$0xff] %v509
    %513 = vst [vmem:[#allocation13 + $0x8] sm:$0xff] %v511
    // Predicated region
    $region54: #{tpu_custom_call.1} parent=1 // pred_check
      _
    $region55: #{tpu_custom_call.1} parent=1 // pred_check_branch
      %515 = sbr.rel (0) target = $region57
    $region56: #{tpu_custom_call.1} parent=1 // pred_region
      %s517 = ssub.s32 256, 256
      %518 = vsyncadd [#allocation4], %s517
      %s519 = sshll.u32 [#allocation13], 4
      %s520 = int_to_ptr.vmem [resolvable:$true] %s519
      %525 = dma.vmem_to_hbm [thread:$0]  %s520, 256, %s7, [#allocation4], 128, 128, 8
    $region57: #{tpu_custom_call.1} parent=1 // pred_fallthru
      _
    // Predicated region
    $region58: #{tpu_custom_call.1} parent=1 // pred_check
      _
    $region59: #{tpu_custom_call.1} parent=1 // pred_check_branch
      %527 = sbr.rel (0) target = $region61
    $region60: #{tpu_custom_call.1} parent=1 // pred_region
      %528 = dma.done [#allocation4], 256
    $region61: #{tpu_custom_call.1} parent=1 // pred_fallthru
      _
    %529 = vsyncpa [#allocation3], 1
    %530 = vsyncpa [#allocation6], 1
    %531 = vsyncpa [#allocation9], 1
    %532 = vsyncpa [#allocation12], 1
    %533 = vsyncpa [#allocation4], 1

</llo_original>
